<compile_context>
chip_gen: v7x
topology: tpu7x:2x2x1
jax: 0.10.0
libtpu: 0.0.40
codegen_flags: <defaults>
</compile_context>

<pallas_src>
import jax
import jax.numpy as jnp
from jax.experimental import pallas as pl
from jax.experimental.pallas import tpu as pltpu


def composite_loss_kernel(rec_ref, cls_ref, w_ref, b_ref, o_ref):
    # All refs are (1,) f32 in SMEM -> pure scalar ops on the scalar core.
    lin = cls_ref[0] * w_ref[0] + b_ref[0]       # Linear(1, 1) on the scalar t
    act = jnp.maximum(lin, 0.0)                  # ReLU
    o_ref[0] = rec_ref[0] + act                  # reconstruction_loss + relu(...)


def composite_loss_forward(reconstruction_loss, classification_loss, weight, bias):
    """reconstruction_loss, classification_loss: scalars (python float or 0-d array).
    weight: nn.Linear(1,1) weight, shape (1,1) (or scalar); bias: shape (1,) (or scalar).
    Returns a scalar f32 loss (same value/semantics as the PyTorch forward)."""
    rec = jnp.asarray(reconstruction_loss, jnp.float32).reshape(1)
    cls = jnp.asarray(classification_loss, jnp.float32).reshape(1)
    w = jnp.asarray(weight, jnp.float32).reshape(1)
    b = jnp.asarray(bias, jnp.float32).reshape(1)

    smem_spec = pl.BlockSpec(memory_space=pltpu.MemorySpace.SMEM)

    out = pl.pallas_call(
        composite_loss_kernel,
        out_shape=jax.ShapeDtypeStruct((1,), jnp.float32),
        in_specs=[smem_spec, smem_spec, smem_spec, smem_spec],
        out_specs=smem_spec,
        # Tiny, but lets XLA schedule/overlap the custom call correctly when
        # this loss sits inside a larger jit.
        cost_estimate=pl.CostEstimate(flops=4, bytes_accessed=20, transcendentals=0),
    )(rec, cls, w, b)
    return out[0]


if __name__ == "__main__":
    key = jax.random.PRNGKey(0)
    k_w, k_b, k_rec, k_cls = jax.random.split(key, 4)

    # Deterministic parameters matching nn.Linear(1, 1) default init
    # (uniform in [-1/sqrt(fan_in), 1/sqrt(fan_in)] with fan_in = 1).
    weight = jax.random.uniform(k_w, (1, 1), jnp.float32, -1.0, 1.0)
    bias = jax.random.uniform(k_b, (1,), jnp.float32, -1.0, 1.0)

    # Small example scalar losses consistent with the module's forward.
    reconstruction_loss = jax.random.uniform(k_rec, (), jnp.float32, 0.0, 2.0)
    classification_loss = jax.random.uniform(k_cls, (), jnp.float32, 0.0, 2.0)

    loss = composite_loss_forward(reconstruction_loss, classification_loss, weight, bias)
    loss = jax.block_until_ready(loss)

    # Plain-JAX reference (same semantics as the PyTorch forward).
    ref = reconstruction_loss + jnp.maximum(weight[0, 0] * classification_loss + bias[0], 0.0)

    assert loss.shape == ()
    assert jnp.allclose(loss, ref, atol=1e-6, rtol=1e-6), (loss, ref)

    print("KERNEL_OK")
</pallas_src>

<mosaic_0001>
module attributes {stable_mosaic.version = 11 : i64} {
  func.func @composite_loss_kernel(%arg0: memref<1xf32, #tpu.memory_space<smem>>, %arg1: memref<1xf32, #tpu.memory_space<smem>>, %arg2: memref<1xf32, #tpu.memory_space<smem>>, %arg3: memref<1xf32, #tpu.memory_space<smem>>, %arg4: memref<1xf32, #tpu.memory_space<smem>>) attributes {dimension_semantics = [], scalar_prefetch = 0 : i64, scratch_operands = 0 : i64, tpu.core_type = #tpu.core_type<tc>} {
    %c0 = arith.constant 0 : index
    %0 = memref.load %arg1[%c0] : memref<1xf32, #tpu.memory_space<smem>>
    %c0_0 = arith.constant 0 : index
    %1 = memref.load %arg2[%c0_0] : memref<1xf32, #tpu.memory_space<smem>>
    %2 = arith.mulf %0, %1 : f32
    %c0_1 = arith.constant 0 : index
    %3 = memref.load %arg3[%c0_1] : memref<1xf32, #tpu.memory_space<smem>>
    %4 = arith.addf %2, %3 : f32
    %cst = arith.constant 0.000000e+00 : f32
    %5 = arith.maximumf %4, %cst : f32
    %c0_2 = arith.constant 0 : index
    %6 = memref.load %arg0[%c0_2] : memref<1xf32, #tpu.memory_space<smem>>
    %7 = arith.addf %6, %5 : f32
    %c0_3 = arith.constant 0 : index
    %8 = memref.load %arg4[%c0_3] : memref<1xf32, #tpu.memory_space<smem>>
    memref.store %7, %arg4[%c0_3] : memref<1xf32, #tpu.memory_space<smem>>
    return
  }
}

</mosaic_0001>

<llo_original>
// kernel: tpu_custom_call.1
$region0: #{tpu_custom_call.1}
  #allocation0 [shape = 'u32[]', space=smem, size = 0x4, offset = 0x4, fixed_abs, tag = 'smem constant byte address 0x4 - core index']
  #allocation1 [shape = 'u32[144,128]{1,0:T(1,128)}', space=vmem, size = 0x12000, scoped, tag = 'internal scratch']
  #allocation2 [shape = 'f32[1]{0:T(128)S(6)}', space=smem, size = 0x200, scoped, tag = 'scoped memory for tpu_custom_call.1']
  #allocation3 [shape = 'f32[1]{0:T(128)S(6)}', space=smem, size = 0x200, scoped, tag = 'scoped memory for tpu_custom_call.1']
  #allocation4 [shape = 'f32[1]{0:T(128)S(6)}', space=smem, size = 0x200, scoped, tag = 'scoped memory for tpu_custom_call.1']
  #allocation5 [shape = 'f32[1]{0:T(128)S(6)}', space=smem, size = 0x200, scoped, tag = 'scoped memory for tpu_custom_call.1']
  %s0 = inlined_call_operand.<no memory space> [shape: f32[1], index: 0, kind: input, shape index: {}]
  %s1 = inlined_call_operand.<no memory space> [shape: f32[1], index: 1, kind: input, shape index: {}]
  %s2 = inlined_call_operand.<no memory space> [shape: f32[1], index: 2, kind: input, shape index: {}]
  %s3 = inlined_call_operand.<no memory space> [shape: f32[1], index: 3, kind: input, shape index: {}]
  %s4 = inlined_call_operand.hbm [shape: f32[1], index: 4, kind: output, shape index: {}]
  %s5 = sld [smem:[#allocation0]]
  $region26: #{tpu_custom_call.1} parent=0
    _
  %s7 = ssub.s32 1, %s5
  %s8 = scalar_select 0, %s7, %s5
  %9 = sst [smem:[#allocation2]] %s0
  %10 = sst [smem:[#allocation3]] %s1
  %11 = sst [smem:[#allocation4]] %s2
  %12 = sst [smem:[#allocation5]] %s3
  $region1: #{tpu_custom_call.1} parent=0
    #allocation6 [shape = 'u8[512]{0}', space=smem, size = 0x200, scoped, tag = 'output window, operand 0, single buffered']
    #allocation7 [shape = 's32[1]{0}', space=sflag, size = 0x4, scoped, tag = 'scoped memory for tpu_custom_call.1']
    %13 = vsyncpa [#allocation7], 0
    // Predicated region
    $region2: #{tpu_custom_call.1} parent=1 // pred_check
      _
    $region3: #{tpu_custom_call.1} parent=1 // pred_check_branch
      %15 = sbr.rel (0) target = $region5
    $region4: #{tpu_custom_call.1} parent=1 // pred_region
      _
    $region5: #{tpu_custom_call.1} parent=1 // pred_fallthru
      _
    // Predicated region
    $region6: #{tpu_custom_call.1} parent=1 // pred_check
      _
    $region7: #{tpu_custom_call.1} parent=1 // pred_check_branch
      %17 = sbr.rel (0) target = $region9
    $region8: #{tpu_custom_call.1} parent=1 // pred_region
      _
    $region9: #{tpu_custom_call.1} parent=1 // pred_fallthru
      _
    // Predicated region
    $region10: #{tpu_custom_call.1} parent=1 // pred_check
      _
    $region11: #{tpu_custom_call.1} parent=1 // pred_check_branch
      %19 = sbr.rel (0) target = $region13
    $region12: #{tpu_custom_call.1} parent=1 // pred_region
      _
    $region13: #{tpu_custom_call.1} parent=1 // pred_fallthru
      _
    // Predicated region
    $region14: #{tpu_custom_call.1} parent=1 // pred_check
      _
    $region15: #{tpu_custom_call.1} parent=1 // pred_check_branch
      %21 = sbr.rel (0) target = $region17
    $region16: #{tpu_custom_call.1} parent=1 // pred_region
      _
    $region17: #{tpu_custom_call.1} parent=1 // pred_fallthru
      _
    %s22 = sld [smem:[#allocation3]]
    %s23 = sld [smem:[#allocation4]]
    %s24 = smul.f32 %s22, %s23
    %s25 = sld [smem:[#allocation5]]
    %s26 = sadd.f32 %s24, %s25
    %s27 = smax.f32 %s26, 0.0
    %s28 = sld [smem:[#allocation2]]
    %s29 = sadd.f32 %s28, %s27
    %s30 = scalar_lea.smem [#allocation6], 0
    %31 = sst [smem:[%s30]] %s29
    // Predicated region
    $region18: #{tpu_custom_call.1} parent=1 // pred_check
      _
    $region19: #{tpu_custom_call.1} parent=1 // pred_check_branch
      %33 = sbr.rel (0) target = $region21
    $region20: #{tpu_custom_call.1} parent=1 // pred_region
      %s35 = ssub.s32 16, 16
      %36 = vsyncadd [#allocation7], %s35
      %39 = dma.smem_to_hbm [#allocation6], 16, %s4, [#allocation7]
    $region21: #{tpu_custom_call.1} parent=1 // pred_fallthru
      _
    // Predicated region
    $region22: #{tpu_custom_call.1} parent=1 // pred_check
      _
    $region23: #{tpu_custom_call.1} parent=1 // pred_check_branch
      %41 = sbr.rel (0) target = $region25
    $region24: #{tpu_custom_call.1} parent=1 // pred_region
      %42 = dma.done [#allocation7], 16
    $region25: #{tpu_custom_call.1} parent=1 // pred_fallthru
      _
    %43 = sfence
    %44 = vsyncpa [#allocation7], 1

</llo_original>
